<compile_context>
chip_gen: v6e
topology: v6e:2x2x1
jax: 0.10.0
libtpu: 0.0.40
codegen_flags: <defaults>
</compile_context>

<pallas_src>
import functools

import jax
import jax.numpy as jnp
from jax import lax
from jax.experimental import pallas as pl
from jax.experimental.pallas import tpu as pltpu

LN_EPS = 1e-5


def _round_up(x, m):
    return (x + m - 1) // m * m


def _lane(d):
    return _round_up(d, 128)


def _layer_norm(x, gamma, beta):
    # x: [tm, d_model] f32; gamma/beta: [1, d_model] f32.
    mean = jnp.mean(x, axis=-1, keepdims=True)
    xc = x - mean
    var = jnp.mean(xc * xc, axis=-1, keepdims=True)
    inv = lax.rsqrt(var + LN_EPS)
    return xc * inv * gamma + beta


def _gelu_exact(x):
    # nn.GELU() default: exact erf formulation.
    return 0.5 * x * (1.0 + lax.erf(x * 0.7071067811865476))


def semantic_ocr_kernel(det_ref, rec_ref, box_ref, embs_ref,
                        w_det_ref, w_rec_ref, p_ref, out_ref):
    # Linear projections on the MXU. Inputs / weights stay in their native
    # dtype (bf16 halves HBM traffic); accumulation is f32.
    h_det = jnp.dot(det_ref[...], w_det_ref[...],
                    preferred_element_type=jnp.float32)
    h_rec = jnp.dot(rec_ref[...], w_rec_ref[...],
                    preferred_element_type=jnp.float32)

    # Packed small parameters: rows 0-3 w_box, 4-6 biases, 7-12 LN gamma/beta.
    p = p_ref[...].astype(jnp.float32)                 # (16, d_model)
    w_box = p[0:4, :]
    b_det, b_rec, b_box = p[4:5, :], p[5:6, :], p[6:7, :]
    g_det, be_det = p[7:8, :], p[8:9, :]
    g_rec, be_rec = p[9:10, :], p[10:11, :]
    g_box, be_box = p[11:12, :], p[12:13, :]

    # K=4 box projection on the VPU (broadcast FMAs) instead of a wasted
    # MXU systolic pass.
    box = box_ref[...].astype(jnp.float32)             # (tm, 4)
    h_box = (box[:, 0:1] * w_box[0:1, :]
             + box[:, 1:2] * w_box[1:2, :]
             + box[:, 2:3] * w_box[2:3, :]
             + box[:, 3:4] * w_box[3:4, :]
             + b_box)

    # Per-branch LayerNorms (bias added before LN, matching nn.Linear + LN).
    h_det = _layer_norm(h_det + b_det, g_det, be_det)
    h_rec = _layer_norm(h_rec + b_rec, g_rec, be_rec)
    h_box = _layer_norm(h_box, g_box, be_box)

    feat = h_det + h_rec + h_box + embs_ref[...].astype(jnp.float32)
    # Dropout = identity in eval mode.
    out_ref[...] = _gelu_exact(feat).astype(out_ref.dtype)


def _choose_row_tile(M, d_det, d_rec, d_model, in_bytes, out_bytes,
                     budget_bytes=40 << 20, tm_cap=1024):
    """Largest row tile (multiple of 8, <= tm_cap) whose double-buffered
    VMEM footprint stays under budget_bytes (safe on v7x's 64 MiB VMEM)."""
    per_row = (
        2 * (_lane(d_det) + _lane(d_rec) + _lane(4) + _lane(d_model)) * in_bytes  # in tiles (2x buffered)
        + 2 * _lane(d_model) * out_bytes                                          # out tile (2x buffered)
        + 4 * _lane(d_model) * 4                                                  # f32 intermediates headroom
    )
    tm = max(8, min(tm_cap, (budget_bytes // max(per_row, 1)) // 8 * 8))
    return min(tm, _round_up(M, 8))


def semantic_ocr_embedding(det, rec, boxes, ocr_embs, packed_params, *,
                           tm=None, vmem_limit_bytes=None):
    """det: [B,N,d_det], rec: [B,N,d_rec], boxes: [B,N,4], ocr_embs: [B,N,d_model]."""
    B, N, d_det = det.shape
    d_rec = rec.shape[-1]
    d_model = ocr_embs.shape[-1]
    M = B * N

    w_det, w_rec, pstack = packed_params
    in_b = max(det.dtype.itemsize, ocr_embs.dtype.itemsize)
    out_b = ocr_embs.dtype.itemsize

    # Effective row tile: big for real workloads, clamped for tiny ones.
    if tm is None:
        tm_eff = _choose_row_tile(M, d_det, d_rec, d_model, in_b, out_b)
    else:
        tm_eff = min(max(8, tm // 8 * 8), _round_up(M, 8))
    M_pad = _round_up(M, tm_eff)

    det2 = det.reshape(M, d_det)
    rec2 = rec.reshape(M, d_rec)
    box2 = boxes.reshape(M, 4)
    emb2 = ocr_embs.reshape(M, d_model)
    if M_pad != M:
        pad = M_pad - M
        det2 = jnp.pad(det2, ((0, pad), (0, 0)))
        rec2 = jnp.pad(rec2, ((0, pad), (0, 0)))
        box2 = jnp.pad(box2, ((0, pad), (0, 0)))
        emb2 = jnp.pad(emb2, ((0, pad), (0, 0)))

    grid = (M_pad // tm_eff,)

    if vmem_limit_bytes is None:
        # Double-buffered input/output tiles + resident weights/params,
        # with lane padding to 128 (VMEM layout). Cap at 56 MiB (fits v7x).
        est = 2 * tm_eff * (_lane(d_det) + _lane(d_rec) + _lane(4) + _lane(d_model)) * in_b
        est += 2 * tm_eff * _lane(d_model) * out_b
        est += 2 * (_round_up(d_det, 8) + _round_up(d_rec, 8) + 16) * _lane(d_model) * in_b
        est += 4 * tm_eff * _lane(d_model) * 4   # f32 intermediates headroom
        vmem_limit_bytes = min(56 << 20, max(2 * est, 16 << 20))

    row_spec = lambda d: pl.BlockSpec((tm_eff, d), lambda i: (i, 0))
    full_spec = lambda r, c: pl.BlockSpec((r, c), lambda i: (0, 0))

    out = pl.pallas_call(
        semantic_ocr_kernel,
        out_shape=jax.ShapeDtypeStruct((M_pad, d_model), ocr_embs.dtype),
        grid=grid,
        in_specs=[
            row_spec(d_det),               # det rows
            row_spec(d_rec),               # rec rows
            row_spec(4),                   # box rows
            row_spec(d_model),             # ocr_embs rows
            full_spec(d_det, d_model),     # w_det  [in, out]
            full_spec(d_rec, d_model),     # w_rec  [in, out]
            full_spec(16, d_model),        # packed w_box/biases/LN params
        ],
        out_specs=pl.BlockSpec((tm_eff, d_model), lambda i: (i, 0)),
        compiler_params=pltpu.CompilerParams(
            dimension_semantics=("parallel",),   # megacore-shardable on v7x
            vmem_limit_bytes=vmem_limit_bytes),
    )(det2, rec2, box2, emb2, w_det, w_rec, pstack)

    if M_pad != M:
        out = out[:M]
    return out.reshape(B, N, d_model)


def init_params(key, d_det, d_rec, d_model, dtype=jnp.float32):
    ks = jax.random.split(key, 6)
    # Linear weights stored as [in, out] (transpose of torch's [out, in]).
    p = dict(
        w_det=jax.random.normal(ks[0], (d_det, d_model), dtype) * (1.0 / jnp.sqrt(d_det)),
        b_det=jax.random.normal(ks[1], (1, d_model), dtype) * 0.01,
        w_rec=jax.random.normal(ks[2], (d_rec, d_model), dtype) * (1.0 / jnp.sqrt(d_rec)),
        b_rec=jax.random.normal(ks[3], (1, d_model), dtype) * 0.01,
        w_box=jax.random.normal(ks[4], (4, d_model), dtype) * 0.5,
        b_box=jax.random.normal(ks[5], (1, d_model), dtype) * 0.01,
        # LayerNorm params: PyTorch default init (gamma=1, beta=0).
        g_det=jnp.ones((1, d_model), dtype), be_det=jnp.zeros((1, d_model), dtype),
        g_rec=jnp.ones((1, d_model), dtype), be_rec=jnp.zeros((1, d_model), dtype),
        g_box=jnp.ones((1, d_model), dtype), be_box=jnp.zeros((1, d_model), dtype),
    )
    return p


def pack_params(p):
    """Pack the small per-row params into one (16, d_model) array."""
    rows = jnp.concatenate([
        p["w_box"],                              # rows 0-3
        p["b_det"], p["b_rec"], p["b_box"],      # rows 4-6
        p["g_det"], p["be_det"],                 # rows 7-8
        p["g_rec"], p["be_rec"],                 # rows 9-10
        p["g_box"], p["be_box"],                 # rows 11-12
    ], axis=0)
    d_model = rows.shape[1]
    pad = jnp.zeros((16 - rows.shape[0], d_model), rows.dtype)
    return p["w_det"], p["w_rec"], jnp.concatenate([rows, pad], axis=0)


def reference_forward(det, rec, boxes, ocr_embs, p):
    def ln(x, g, b):
        m = jnp.mean(x, -1, keepdims=True)
        v = jnp.mean((x - m) ** 2, -1, keepdims=True)
        return (x - m) / jnp.sqrt(v + LN_EPS) * g + b

    h_det = ln(det @ p["w_det"] + p["b_det"], p["g_det"], p["be_det"])
    h_rec = ln(rec @ p["w_rec"] + p["b_rec"], p["g_rec"], p["be_rec"])
    h_box = ln(boxes @ p["w_box"] + p["b_box"], p["g_box"], p["be_box"])
    feat = h_det + h_rec + h_box + ocr_embs
    return jax.nn.gelu(feat, approximate=False)


if __name__ == "__main__":
    # Small config consistent with the module's forward:
    #   B=2 batch entries, max_scene_text N=8 OCR tokens, d_det=d_rec=d_model=32.
    B, N, d_det, d_rec, d_model = 2, 8, 32, 32, 32

    key = jax.random.PRNGKey(0)
    k_det, k_rec, k_box, k_emb, k_par = jax.random.split(key, 5)

    det_features = jax.random.normal(k_det, (B, N, d_det), jnp.float32)
    rec_features = jax.random.normal(k_rec, (B, N, d_rec), jnp.float32)
    ocr_boxes = jax.random.uniform(k_box, (B, N, 4), jnp.float32)
    ocr_embs = jax.random.normal(k_emb, (B, N, d_model), jnp.float32)

    params = init_params(k_par, d_det, d_rec, d_model)
    packed = pack_params(params)

    out = semantic_ocr_embedding(det_features, rec_features, ocr_boxes,
                                 ocr_embs, packed)
    out = jax.block_until_ready(out)
    ref = reference_forward(det_features, rec_features, ocr_boxes, ocr_embs, params)
    assert out.shape == (B, N, d_model)
    assert jnp.allclose(out, ref, atol=1e-5, rtol=1e-5), "mismatch vs reference"

    # Second case exercising the row-padding path (M not a multiple of 8).
    B2, N2 = 2, 7
    det2 = jax.random.normal(k_det, (B2, N2, d_det), jnp.float32)
    rec2 = jax.random.normal(k_rec, (B2, N2, d_rec), jnp.float32)
    box2 = jax.random.uniform(k_box, (B2, N2, 4), jnp.float32)
    emb2 = jax.random.normal(k_emb, (B2, N2, d_model), jnp.float32)
    out2 = jax.block_until_ready(
        semantic_ocr_embedding(det2, rec2, box2, emb2, packed))
    ref2 = reference_forward(det2, rec2, box2, emb2, params)
    assert out2.shape == (B2, N2, d_model)
    assert jnp.allclose(out2, ref2, atol=1e-5, rtol=1e-5), "mismatch vs reference (padded)"

    # Third case exercising the multi-tile grid path (small forced tile).
    B3, N3 = 3, 16
    det3 = jax.random.normal(k_det, (B3, N3, d_det), jnp.float32)
    rec3 = jax.random.normal(k_rec, (B3, N3, d_rec), jnp.float32)
    box3 = jax.random.uniform(k_box, (B3, N3, 4), jnp.float32)
    emb3 = jax.random.normal(k_emb, (B3, N3, d_model), jnp.float32)
    out3 = jax.block_until_ready(
        semantic_ocr_embedding(det3, rec3, box3, emb3, packed, tm=16))
    ref3 = reference_forward(det3, rec3, box3, emb3, params)
    assert out3.shape == (B3, N3, d_model)
    assert jnp.allclose(out3, ref3, atol=1e-5, rtol=1e-5), "mismatch vs reference (multi-tile)"

    print("KERNEL_OK")
</pallas_src>

<mosaic_0001>
module attributes {stable_mosaic.version = 11 : i64} {
  func.func @semantic_ocr_kernel(%arg0: i32, %arg1: memref<16x32xf32, #tpu.memory_space<vmem>>, %arg2: memref<16x32xf32, #tpu.memory_space<vmem>>, %arg3: memref<16x4xf32, #tpu.memory_space<vmem>>, %arg4: memref<16x32xf32, #tpu.memory_space<vmem>>, %arg5: memref<32x32xf32, #tpu.memory_space<vmem>>, %arg6: memref<32x32xf32, #tpu.memory_space<vmem>>, %arg7: memref<16x32xf32, #tpu.memory_space<vmem>>, %arg8: memref<16x32xf32, #tpu.memory_space<vmem>>) attributes {dimension_semantics = [#tpu.dimension_semantics<parallel>], iteration_bounds = array<i64: 1>, scalar_prefetch = 0 : i64, scratch_operands = 0 : i64, tpu.core_type = #tpu.core_type<tc>, window_params = [{transform_indices = @transform_0, window_bounds = array<i64: 16, 32>}, {transform_indices = @transform_1, window_bounds = array<i64: 16, 32>}, {transform_indices = @transform_2, window_bounds = array<i64: 16, 4>}, {transform_indices = @transform_3, window_bounds = array<i64: 16, 32>}, {pipeline_mode = #tpu.pipeline_mode<synchronous>, transform_indices = @transform_4, window_bounds = array<i64: 32, 32>}, {pipeline_mode = #tpu.pipeline_mode<synchronous>, transform_indices = @transform_5, window_bounds = array<i64: 32, 32>}, {pipeline_mode = #tpu.pipeline_mode<synchronous>, transform_indices = @transform_6, window_bounds = array<i64: 16, 32>}, {transform_indices = @transform_7, window_bounds = array<i64: 16, 32>}]} {
    %c0 = arith.constant 0 : index
    %c0_0 = arith.constant 0 : index
    %0 = vector.load %arg1[%c0, %c0_0] : memref<16x32xf32, #tpu.memory_space<vmem>>, vector<16x32xf32>
    %c0_1 = arith.constant 0 : index
    %c0_2 = arith.constant 0 : index
    %1 = vector.load %arg5[%c0_1, %c0_2] : memref<32x32xf32, #tpu.memory_space<vmem>>, vector<32x32xf32>
    %cst = arith.constant dense<0.000000e+00> : vector<16x32xf32>
    %2 = tpu.matmul %0, %1, %cst {dimension_numbers = #tpu.dot_dimension_numbers<[1], [0], [0], [1], [0, 0, 1, 1], [], []>} : vector<16x32xf32>, vector<32x32xf32>, vector<16x32xf32> -> vector<16x32xf32>
    %c0_3 = arith.constant 0 : index
    %c0_4 = arith.constant 0 : index
    %3 = vector.load %arg2[%c0_3, %c0_4] : memref<16x32xf32, #tpu.memory_space<vmem>>, vector<16x32xf32>
    %c0_5 = arith.constant 0 : index
    %c0_6 = arith.constant 0 : index
    %4 = vector.load %arg6[%c0_5, %c0_6] : memref<32x32xf32, #tpu.memory_space<vmem>>, vector<32x32xf32>
    %cst_7 = arith.constant dense<0.000000e+00> : vector<16x32xf32>
    %5 = tpu.matmul %3, %4, %cst_7 {dimension_numbers = #tpu.dot_dimension_numbers<[1], [0], [0], [1], [0, 0, 1, 1], [], []>} : vector<16x32xf32>, vector<32x32xf32>, vector<16x32xf32> -> vector<16x32xf32>
    %c0_8 = arith.constant 0 : index
    %c0_9 = arith.constant 0 : index
    %6 = vector.load %arg7[%c0_8, %c0_9] : memref<16x32xf32, #tpu.memory_space<vmem>>, vector<16x32xf32>
    %7 = vector.extract_strided_slice %6 {offsets = [0, 0], sizes = [4, 32], strides = [1, 1]} : vector<16x32xf32> to vector<4x32xf32>
    %8 = vector.extract_strided_slice %6 {offsets = [4, 0], sizes = [1, 32], strides = [1, 1]} : vector<16x32xf32> to vector<1x32xf32>
    %9 = vector.extract_strided_slice %6 {offsets = [5, 0], sizes = [1, 32], strides = [1, 1]} : vector<16x32xf32> to vector<1x32xf32>
    %10 = vector.extract_strided_slice %6 {offsets = [6, 0], sizes = [1, 32], strides = [1, 1]} : vector<16x32xf32> to vector<1x32xf32>
    %11 = vector.extract_strided_slice %6 {offsets = [7, 0], sizes = [1, 32], strides = [1, 1]} : vector<16x32xf32> to vector<1x32xf32>
    %12 = vector.extract_strided_slice %6 {offsets = [8, 0], sizes = [1, 32], strides = [1, 1]} : vector<16x32xf32> to vector<1x32xf32>
    %13 = vector.extract_strided_slice %6 {offsets = [9, 0], sizes = [1, 32], strides = [1, 1]} : vector<16x32xf32> to vector<1x32xf32>
    %14 = vector.extract_strided_slice %6 {offsets = [10, 0], sizes = [1, 32], strides = [1, 1]} : vector<16x32xf32> to vector<1x32xf32>
    %15 = vector.extract_strided_slice %6 {offsets = [11, 0], sizes = [1, 32], strides = [1, 1]} : vector<16x32xf32> to vector<1x32xf32>
    %16 = vector.extract_strided_slice %6 {offsets = [12, 0], sizes = [1, 32], strides = [1, 1]} : vector<16x32xf32> to vector<1x32xf32>
    %c0_10 = arith.constant 0 : index
    %c0_11 = arith.constant 0 : index
    %17 = vector.load %arg3[%c0_10, %c0_11] : memref<16x4xf32, #tpu.memory_space<vmem>>, vector<16x4xf32>
    %18 = vector.extract_strided_slice %17 {offsets = [0, 0], sizes = [16, 1], strides = [1, 1]} : vector<16x4xf32> to vector<16x1xf32>
    %19 = vector.extract_strided_slice %7 {offsets = [0, 0], sizes = [1, 32], strides = [1, 1]} : vector<4x32xf32> to vector<1x32xf32>
    %20 = vector.broadcast %18 : vector<16x1xf32> to vector<16x32xf32>
    %21 = vector.broadcast %19 : vector<1x32xf32> to vector<16x32xf32>
    %22 = arith.mulf %20, %21 : vector<16x32xf32>
    %23 = vector.extract_strided_slice %17 {offsets = [0, 1], sizes = [16, 1], strides = [1, 1]} : vector<16x4xf32> to vector<16x1xf32>
    %24 = vector.extract_strided_slice %7 {offsets = [1, 0], sizes = [1, 32], strides = [1, 1]} : vector<4x32xf32> to vector<1x32xf32>
    %25 = vector.broadcast %23 : vector<16x1xf32> to vector<16x32xf32>
    %26 = vector.broadcast %24 : vector<1x32xf32> to vector<16x32xf32>
    %27 = arith.mulf %25, %26 : vector<16x32xf32>
    %28 = arith.addf %22, %27 : vector<16x32xf32>
    %29 = vector.extract_strided_slice %17 {offsets = [0, 2], sizes = [16, 1], strides = [1, 1]} : vector<16x4xf32> to vector<16x1xf32>
    %30 = vector.extract_strided_slice %7 {offsets = [2, 0], sizes = [1, 32], strides = [1, 1]} : vector<4x32xf32> to vector<1x32xf32>
    %31 = vector.broadcast %29 : vector<16x1xf32> to vector<16x32xf32>
    %32 = vector.broadcast %30 : vector<1x32xf32> to vector<16x32xf32>
    %33 = arith.mulf %31, %32 : vector<16x32xf32>
    %34 = arith.addf %28, %33 : vector<16x32xf32>
    %35 = vector.extract_strided_slice %17 {offsets = [0, 3], sizes = [16, 1], strides = [1, 1]} : vector<16x4xf32> to vector<16x1xf32>
    %36 = vector.extract_strided_slice %7 {offsets = [3, 0], sizes = [1, 32], strides = [1, 1]} : vector<4x32xf32> to vector<1x32xf32>
    %37 = vector.broadcast %35 : vector<16x1xf32> to vector<16x32xf32>
    %38 = vector.broadcast %36 : vector<1x32xf32> to vector<16x32xf32>
    %39 = arith.mulf %37, %38 : vector<16x32xf32>
    %40 = arith.addf %34, %39 : vector<16x32xf32>
    %41 = vector.broadcast %10 : vector<1x32xf32> to vector<16x32xf32>
    %42 = arith.addf %40, %41 : vector<16x32xf32>
    %43 = vector.broadcast %8 : vector<1x32xf32> to vector<16x32xf32>
    %44 = arith.addf %2, %43 : vector<16x32xf32>
    %cst_12 = arith.constant dense<0.000000e+00> : vector<16xf32>
    %45 = vector.multi_reduction <add>, %44, %cst_12 [1] : vector<16x32xf32> to vector<16xf32>
    %46 = vector.shape_cast %45 : vector<16xf32> to vector<16x1xf32>
    %cst_13 = arith.constant 3.200000e+01 : f32
    %47 = vector.broadcast %cst_13 : f32 to vector<16x1xf32>
    %48 = arith.divf %46, %47 : vector<16x1xf32>
    %49 = vector.broadcast %48 : vector<16x1xf32> to vector<16x32xf32>
    %50 = arith.subf %44, %49 : vector<16x32xf32>
    %51 = arith.mulf %50, %50 : vector<16x32xf32>
    %cst_14 = arith.constant dense<0.000000e+00> : vector<16xf32>
    %52 = vector.multi_reduction <add>, %51, %cst_14 [1] : vector<16x32xf32> to vector<16xf32>
    %53 = vector.shape_cast %52 : vector<16xf32> to vector<16x1xf32>
    %cst_15 = arith.constant 3.200000e+01 : f32
    %54 = vector.broadcast %cst_15 : f32 to vector<16x1xf32>
    %55 = arith.divf %53, %54 : vector<16x1xf32>
    %cst_16 = arith.constant 9.99999974E-6 : f32
    %56 = vector.broadcast %cst_16 : f32 to vector<16x1xf32>
    %57 = arith.addf %55, %56 : vector<16x1xf32>
    %58 = math.rsqrt %57 : vector<16x1xf32>
    %59 = vector.broadcast %58 : vector<16x1xf32> to vector<16x32xf32>
    %60 = arith.mulf %50, %59 : vector<16x32xf32>
    %61 = vector.broadcast %11 : vector<1x32xf32> to vector<16x32xf32>
    %62 = arith.mulf %60, %61 : vector<16x32xf32>
    %63 = vector.broadcast %12 : vector<1x32xf32> to vector<16x32xf32>
    %64 = arith.addf %62, %63 : vector<16x32xf32>
    %65 = vector.broadcast %9 : vector<1x32xf32> to vector<16x32xf32>
    %66 = arith.addf %5, %65 : vector<16x32xf32>
    %cst_17 = arith.constant dense<0.000000e+00> : vector<16xf32>
    %67 = vector.multi_reduction <add>, %66, %cst_17 [1] : vector<16x32xf32> to vector<16xf32>
    %68 = vector.shape_cast %67 : vector<16xf32> to vector<16x1xf32>
    %cst_18 = arith.constant 3.200000e+01 : f32
    %69 = vector.broadcast %cst_18 : f32 to vector<16x1xf32>
    %70 = arith.divf %68, %69 : vector<16x1xf32>
    %71 = vector.broadcast %70 : vector<16x1xf32> to vector<16x32xf32>
    %72 = arith.subf %66, %71 : vector<16x32xf32>
    %73 = arith.mulf %72, %72 : vector<16x32xf32>
    %cst_19 = arith.constant dense<0.000000e+00> : vector<16xf32>
    %74 = vector.multi_reduction <add>, %73, %cst_19 [1] : vector<16x32xf32> to vector<16xf32>
    %75 = vector.shape_cast %74 : vector<16xf32> to vector<16x1xf32>
    %cst_20 = arith.constant 3.200000e+01 : f32
    %76 = vector.broadcast %cst_20 : f32 to vector<16x1xf32>
    %77 = arith.divf %75, %76 : vector<16x1xf32>
    %cst_21 = arith.constant 9.99999974E-6 : f32
    %78 = vector.broadcast %cst_21 : f32 to vector<16x1xf32>
    %79 = arith.addf %77, %78 : vector<16x1xf32>
    %80 = math.rsqrt %79 : vector<16x1xf32>
    %81 = vector.broadcast %80 : vector<16x1xf32> to vector<16x32xf32>
    %82 = arith.mulf %72, %81 : vector<16x32xf32>
    %83 = vector.broadcast %13 : vector<1x32xf32> to vector<16x32xf32>
    %84 = arith.mulf %82, %83 : vector<16x32xf32>
    %85 = vector.broadcast %14 : vector<1x32xf32> to vector<16x32xf32>
    %86 = arith.addf %84, %85 : vector<16x32xf32>
    %cst_22 = arith.constant dense<0.000000e+00> : vector<16xf32>
    %87 = vector.multi_reduction <add>, %42, %cst_22 [1] : vector<16x32xf32> to vector<16xf32>
    %88 = vector.shape_cast %87 : vector<16xf32> to vector<16x1xf32>
    %cst_23 = arith.constant 3.200000e+01 : f32
    %89 = vector.broadcast %cst_23 : f32 to vector<16x1xf32>
    %90 = arith.divf %88, %89 : vector<16x1xf32>
    %91 = vector.broadcast %90 : vector<16x1xf32> to vector<16x32xf32>
    %92 = arith.subf %42, %91 : vector<16x32xf32>
    %93 = arith.mulf %92, %92 : vector<16x32xf32>
    %cst_24 = arith.constant dense<0.000000e+00> : vector<16xf32>
    %94 = vector.multi_reduction <add>, %93, %cst_24 [1] : vector<16x32xf32> to vector<16xf32>
    %95 = vector.shape_cast %94 : vector<16xf32> to vector<16x1xf32>
    %cst_25 = arith.constant 3.200000e+01 : f32
    %96 = vector.broadcast %cst_25 : f32 to vector<16x1xf32>
    %97 = arith.divf %95, %96 : vector<16x1xf32>
    %cst_26 = arith.constant 9.99999974E-6 : f32
    %98 = vector.broadcast %cst_26 : f32 to vector<16x1xf32>
    %99 = arith.addf %97, %98 : vector<16x1xf32>
    %100 = math.rsqrt %99 : vector<16x1xf32>
    %101 = vector.broadcast %100 : vector<16x1xf32> to vector<16x32xf32>
    %102 = arith.mulf %92, %101 : vector<16x32xf32>
    %103 = vector.broadcast %15 : vector<1x32xf32> to vector<16x32xf32>
    %104 = arith.mulf %102, %103 : vector<16x32xf32>
    %105 = vector.broadcast %16 : vector<1x32xf32> to vector<16x32xf32>
    %106 = arith.addf %104, %105 : vector<16x32xf32>
    %107 = arith.addf %64, %86 : vector<16x32xf32>
    %108 = arith.addf %107, %106 : vector<16x32xf32>
    %c0_27 = arith.constant 0 : index
    %c0_28 = arith.constant 0 : index
    %109 = vector.load %arg4[%c0_27, %c0_28] : memref<16x32xf32, #tpu.memory_space<vmem>>, vector<16x32xf32>
    %110 = arith.addf %108, %109 : vector<16x32xf32>
    %cst_29 = arith.constant 5.000000e-01 : f32
    %111 = vector.broadcast %cst_29 : f32 to vector<16x32xf32>
    %112 = arith.mulf %111, %110 : vector<16x32xf32>
    %cst_30 = arith.constant 0.707106769 : f32
    %113 = vector.broadcast %cst_30 : f32 to vector<16x32xf32>
    %114 = arith.mulf %110, %113 : vector<16x32xf32>
    %115 = math.erf %114 : vector<16x32xf32>
    %cst_31 = arith.constant 1.000000e+00 : f32
    %116 = vector.broadcast %cst_31 : f32 to vector<16x32xf32>
    %117 = arith.addf %116, %115 : vector<16x32xf32>
    %118 = arith.mulf %112, %117 : vector<16x32xf32>
    %c0_32 = arith.constant 0 : index
    %c0_33 = arith.constant 0 : index
    %119 = vector.load %arg8[%c0_32, %c0_33] : memref<16x32xf32, #tpu.memory_space<vmem>>, vector<16x32xf32>
    tpu.vector_store %arg8[%c0_32, %c0_33], %118 {strides = array<i32>} : memref<16x32xf32, #tpu.memory_space<vmem>>, vector<16x32xf32>,
    return
  }
  func.func @transform_0(%arg0: i32) -> (i32, i32) {
    %c0_i32 = arith.constant 0 : i32
    %c0_i32_0 = arith.constant 0 : i32
    return %arg0, %c0_i32 : i32, i32
  }
  func.func @transform_1(%arg0: i32) -> (i32, i32) {
    %c0_i32 = arith.constant 0 : i32
    %c0_i32_0 = arith.constant 0 : i32
    return %arg0, %c0_i32 : i32, i32
  }
  func.func @transform_2(%arg0: i32) -> (i32, i32) {
    %c0_i32 = arith.constant 0 : i32
    %c0_i32_0 = arith.constant 0 : i32
    return %arg0, %c0_i32 : i32, i32
  }
  func.func @transform_3(%arg0: i32) -> (i32, i32) {
    %c0_i32 = arith.constant 0 : i32
    %c0_i32_0 = arith.constant 0 : i32
    return %arg0, %c0_i32 : i32, i32
  }
  func.func @transform_4(%arg0: i32) -> (i32, i32) {
    %c0_i32 = arith.constant 0 : i32
    %c0_i32_0 = arith.constant 0 : i32
    %c0_i32_1 = arith.constant 0 : i32
    return %c0_i32, %c0_i32_0 : i32, i32
  }
  func.func @transform_5(%arg0: i32) -> (i32, i32) {
    %c0_i32 = arith.constant 0 : i32
    %c0_i32_0 = arith.constant 0 : i32
    %c0_i32_1 = arith.constant 0 : i32
    return %c0_i32, %c0_i32_0 : i32, i32
  }
  func.func @transform_6(%arg0: i32) -> (i32, i32) {
    %c0_i32 = arith.constant 0 : i32
    %c0_i32_0 = arith.constant 0 : i32
    %c0_i32_1 = arith.constant 0 : i32
    return %c0_i32, %c0_i32_0 : i32, i32
  }
  func.func @transform_7(%arg0: i32) -> (i32, i32) {
    %c0_i32 = arith.constant 0 : i32
    %c0_i32_0 = arith.constant 0 : i32
    return %arg0, %c0_i32 : i32, i32
  }
}

</mosaic_0001>

<llo_original>
// kernel: tpu_custom_call.1
$region0: #{tpu_custom_call.1}
  #allocation0 [shape = 'u32[]', space=smem, size = 0x4, offset = 0x4, fixed_abs, tag = 'smem constant byte address 0x4 - core index']
  #allocation1 [shape = 'u32[144,128]{1,0:T(1,128)}', space=vmem, size = 0x12000, scoped, tag = 'internal scratch']
  %s0 = inlined_call_operand.vmem [shape: f32[16,32], index: 0, kind: input, shape index: {}]
  %s1 = inlined_call_operand.hbm [shape: f32[16,32], index: 1, kind: input, shape index: {}]
  %s2 = inlined_call_operand.vmem [shape: f32[16,4], index: 2, kind: input, shape index: {}]
  %s3 = inlined_call_operand.hbm [shape: f32[16,32], index: 3, kind: input, shape index: {}]
  %s4 = inlined_call_operand.hbm [shape: f32[32,32], index: 4, kind: input, shape index: {}]
  %s5 = inlined_call_operand.hbm [shape: f32[32,32], index: 5, kind: input, shape index: {}]
  %s6 = inlined_call_operand.hbm [shape: f32[16,32], index: 6, kind: input, shape index: {}]
  %s7 = inlined_call_operand.hbm [shape: f32[16,32], index: 7, kind: output, shape index: {}]
  %s8 = sld [smem:[#allocation0]]
  $region58: #{tpu_custom_call.1} parent=0
    _
  %s10 = ssub.s32 1, %s8
  %s11 = scalar_select 0, %s10, %s8
  $region1: #{tpu_custom_call.1} parent=0
    #allocation2 [shape = 'u8[8192]{0}', space=vmem, size = 0x2000, scoped, tag = 'input window, operand 1, single buffered']
    #allocation3 [shape = 's32[1]{0}', space=sflag, size = 0x4, scoped, tag = 'scoped memory for tpu_custom_call.1']
    #allocation4 [shape = 's32[1]{0}', space=sflag, size = 0x4, scoped, tag = 'scoped memory for tpu_custom_call.1']
    #allocation5 [shape = 'u8[8192]{0}', space=vmem, size = 0x2000, scoped, tag = 'input window, operand 3, single buffered']
    #allocation6 [shape = 's32[1]{0}', space=sflag, size = 0x4, scoped, tag = 'scoped memory for tpu_custom_call.1']
    #allocation7 [shape = 'u8[16384]{0}', space=vmem, size = 0x4000, scoped, tag = 'input window, operand 4, single buffered']
    #allocation8 [shape = 'u8[16384]{0}', space=vmem, size = 0x4000, scoped, tag = 'input window, operand 5, single buffered']
    #allocation9 [shape = 's32[1]{0}', space=sflag, size = 0x4, scoped, tag = 'scoped memory for tpu_custom_call.1']
    #allocation10 [shape = 'u8[8192]{0}', space=vmem, size = 0x2000, scoped, tag = 'input window, operand 6, single buffered']
    #allocation11 [shape = 'u8[8192]{0}', space=vmem, size = 0x2000, scoped, tag = 'output window, operand 0, single buffered']
    %12 = vsyncpa [#allocation3], 0
    %13 = vsyncpa [#allocation6], 0
    %14 = vsyncpa [#allocation9], 0
    %15 = vsyncpa [#allocation4], 0
    // Predicated region
    $region2: #{tpu_custom_call.1} parent=1 // pred_check
      _
    $region3: #{tpu_custom_call.1} parent=1 // pred_check_branch
      %17 = sbr.rel (0) target = $region5
    $region4: #{tpu_custom_call.1} parent=1 // pred_region
      _
    $region5: #{tpu_custom_call.1} parent=1 // pred_fallthru
      _
    // Predicated region
    $region6: #{tpu_custom_call.1} parent=1 // pred_check
      _
    $region7: #{tpu_custom_call.1} parent=1 // pred_check_branch
      %19 = sbr.rel (0) target = $region9
    $region8: #{tpu_custom_call.1} parent=1 // pred_region
      %s21 = ssub.s32 256, 256
      %22 = vsyncadd [#allocation3], %s21
      %s23 = sshll.u32 [#allocation2], 4
      %s24 = int_to_ptr.vmem [resolvable:$true] %s23
      %29 = dma.hbm_to_vmem [thread:$0]  %s1, 256, %s24, [#allocation3], 128, 128, 8
    $region9: #{tpu_custom_call.1} parent=1 // pred_fallthru
      _
    // Predicated region
    $region10: #{tpu_custom_call.1} parent=1 // pred_check
      _
    $region11: #{tpu_custom_call.1} parent=1 // pred_check_branch
      %31 = sbr.rel (0) target = $region13
    $region12: #{tpu_custom_call.1} parent=1 // pred_region
      _
    $region13: #{tpu_custom_call.1} parent=1 // pred_fallthru
      _
    // Predicated region
    $region14: #{tpu_custom_call.1} parent=1 // pred_check
      _
    $region15: #{tpu_custom_call.1} parent=1 // pred_check_branch
      %33 = sbr.rel (0) target = $region17
    $region16: #{tpu_custom_call.1} parent=1 // pred_region
      %s35 = ssub.s32 256, 256
      %36 = vsyncadd [#allocation6], %s35
      %s37 = sshll.u32 [#allocation5], 4
      %s38 = int_to_ptr.vmem [resolvable:$true] %s37
      %43 = dma.hbm_to_vmem [thread:$0]  %s3, 256, %s38, [#allocation6], 128, 128, 8
    $region17: #{tpu_custom_call.1} parent=1 // pred_fallthru
      _
    // Predicated region
    $region18: #{tpu_custom_call.1} parent=1 // pred_check
      _
    $region19: #{tpu_custom_call.1} parent=1 // pred_check_branch
      %45 = sbr.rel (0) target = $region21
    $region20: #{tpu_custom_call.1} parent=1 // pred_region
      %s47 = ssub.s32 512, 512
      %48 = vsyncadd [#allocation6], %s47
      %s49 = sshll.u32 [#allocation7], 4
      %s50 = int_to_ptr.vmem [resolvable:$true] %s49
      %55 = dma.hbm_to_vmem [thread:$0]  %s4, 512, %s50, [#allocation6], 128, 128, 8
    $region21: #{tpu_custom_call.1} parent=1 // pred_fallthru
      _
    // Predicated region
    $region22: #{tpu_custom_call.1} parent=1 // pred_check
      _
    $region23: #{tpu_custom_call.1} parent=1 // pred_check_branch
      %57 = sbr.rel (0) target = $region25
    $region24: #{tpu_custom_call.1} parent=1 // pred_region
      %s59 = ssub.s32 512, 512
      %60 = vsyncadd [#allocation9], %s59
      %s61 = sshll.u32 [#allocation8], 4
      %s62 = int_to_ptr.vmem [resolvable:$true] %s61
      %67 = dma.hbm_to_vmem [thread:$0]  %s5, 512, %s62, [#allocation9], 128, 128, 8
    $region25: #{tpu_custom_call.1} parent=1 // pred_fallthru
      _
    // Predicated region
    $region26: #{tpu_custom_call.1} parent=1 // pred_check
      _
    $region27: #{tpu_custom_call.1} parent=1 // pred_check_branch
      %69 = sbr.rel (0) target = $region29
    $region28: #{tpu_custom_call.1} parent=1 // pred_region
      %s71 = ssub.s32 256, 256
      %72 = vsyncadd [#allocation9], %s71
      %s73 = sshll.u32 [#allocation10], 4
      %s74 = int_to_ptr.vmem [resolvable:$true] %s73
      %79 = dma.hbm_to_vmem [thread:$0]  %s6, 256, %s74, [#allocation9], 128, 128, 8
    $region29: #{tpu_custom_call.1} parent=1 // pred_fallthru
      _
    // Predicated region
    $region30: #{tpu_custom_call.1} parent=1 // pred_check
      _
    $region31: #{tpu_custom_call.1} parent=1 // pred_check_branch
      %81 = sbr.rel (0) target = $region33
    $region32: #{tpu_custom_call.1} parent=1 // pred_region
      %82 = dma.done [#allocation3], 256
    $region33: #{tpu_custom_call.1} parent=1 // pred_fallthru
      _
    // Predicated region
    $region34: #{tpu_custom_call.1} parent=1 // pred_check
      _
    $region35: #{tpu_custom_call.1} parent=1 // pred_check_branch
      %84 = sbr.rel (0) target = $region37
    $region36: #{tpu_custom_call.1} parent=1 // pred_region
      %85 = dma.done [#allocation6], 256
    $region37: #{tpu_custom_call.1} parent=1 // pred_fallthru
      _
    // Predicated region
    $region38: #{tpu_custom_call.1} parent=1 // pred_check
      _
    $region39: #{tpu_custom_call.1} parent=1 // pred_check_branch
      %87 = sbr.rel (0) target = $region41
    $region40: #{tpu_custom_call.1} parent=1 // pred_region
      %88 = dma.done [#allocation6], 512
    $region41: #{tpu_custom_call.1} parent=1 // pred_fallthru
      _
    // Predicated region
    $region42: #{tpu_custom_call.1} parent=1 // pred_check
      _
    $region43: #{tpu_custom_call.1} parent=1 // pred_check_branch
      %90 = sbr.rel (0) target = $region45
    $region44: #{tpu_custom_call.1} parent=1 // pred_region
      %91 = dma.done [#allocation9], 512
    $region45: #{tpu_custom_call.1} parent=1 // pred_fallthru
      _
    // Predicated region
    $region46: #{tpu_custom_call.1} parent=1 // pred_check
      _
    $region47: #{tpu_custom_call.1} parent=1 // pred_check_branch
      %93 = sbr.rel (0) target = $region49
    $region48: #{tpu_custom_call.1} parent=1 // pred_region
      %94 = dma.done [#allocation9], 256
    $region49: #{tpu_custom_call.1} parent=1 // pred_fallthru
      _
    %v95 = vld [vmem:[%s0] sm:$0xff]
    %v96 = vld [vmem:[%s0 + $0x8] sm:$0xff]
    %v97 = vld [vmem:[#allocation7] sm:$0xff]
    %v98 = vld [vmem:[#allocation7 + $0x8] sm:$0xff]
    %v99 = vld [vmem:[#allocation7 + $0x10] sm:$0xff]
    %v100 = vld [vmem:[#allocation7 + $0x18] sm:$0xff]
    %v101 = vld [vmem:[#allocation2] sm:$0xff]
    %v102 = vld [vmem:[#allocation2 + $0x8] sm:$0xff]
    %v103 = vld [vmem:[#allocation8] sm:$0xff]
    %v104 = vld [vmem:[#allocation8 + $0x8] sm:$0xff]
    %v105 = vld [vmem:[#allocation8 + $0x10] sm:$0xff]
    %v106 = vld [vmem:[#allocation8 + $0x18] sm:$0xff]
    %v107 = vld [vmem:[#allocation10] sm:$0xff]
    %v108 = vld [vmem:[#allocation10 + $0x8] sm:$0xff]
    %v109 = vld [vmem:[%s2] sm:$0xff]
    %v110 = vld [vmem:[%s2 + $0x8] sm:$0xff]
    %112 = vset.pattern.permute.xlu0 0
    %113 = vperm.xlu0 %112, %v109
    %v114 = vpop.permute.xlu0 %113
    %117 = vset.pattern.permute.xlu0 0
    %118 = vperm.xlu0 %117, %v110
    %v119 = vpop.permute.xlu0 %118
    %v121 = vlaneseq
    %v122 = vshrl.u32 %v121, 7
    %v123 = vsub.s32 0, %v122
    %v124 = vrot.slane %v107, %v123
    %v125 = vmul.f32 %v114, %v124
    %v126 = vmul.f32 %v119, %v124
    %127 = vset.pattern.permute.xlu0 1
    %128 = vperm.xlu0 %127, %v109
    %v129 = vpop.permute.xlu0 %128
    %131 = vset.pattern.permute.xlu0 1
    %132 = vperm.xlu0 %131, %v110
    %v133 = vpop.permute.xlu0 %132
    %v135 = vlaneseq
    %v136 = vshrl.u32 %v135, 7
    %v137 = vsub.s32 1, %v136
    %v138 = vrot.slane %v107, %v137
    %v139 = vmul.f32 %v129, %v138
    %v140 = vmul.f32 %v133, %v138
    %v141 = vadd.f32 %v125, %v139
    %v142 = vadd.f32 %v126, %v140
    %143 = vset.pattern.permute.xlu0 2
    %144 = vperm.xlu0 %143, %v109
    %v145 = vpop.permute.xlu0 %144
    %147 = vset.pattern.permute.xlu0 2
    %148 = vperm.xlu0 %147, %v110
    %v149 = vpop.permute.xlu0 %148
    %v151 = vlaneseq
    %v152 = vshrl.u32 %v151, 7
    %v153 = vsub.s32 2, %v152
    %v154 = vrot.slane %v107, %v153
    %v155 = vmul.f32 %v145, %v154
    %v156 = vmul.f32 %v149, %v154
    %v157 = vadd.f32 %v141, %v155
    %v158 = vadd.f32 %v142, %v156
    %159 = vset.pattern.permute.xlu0 3
    %160 = vperm.xlu0 %159, %v109
    %v161 = vpop.permute.xlu0 %160
    %163 = vset.pattern.permute.xlu0 3
    %164 = vperm.xlu0 %163, %v110
    %v165 = vpop.permute.xlu0 %164
    %v167 = vlaneseq
    %v168 = vshrl.u32 %v167, 7
    %v169 = vsub.s32 3, %v168
    %v170 = vrot.slane %v107, %v169
    %v171 = vmul.f32 %v161, %v170
    %v172 = vmul.f32 %v165, %v170
    %v173 = vadd.f32 %v157, %v171
    %v174 = vadd.f32 %v158, %v172
    %v175 = vlaneseq
    %v176 = vshrl.u32 %v175, 7
    %v177 = vsub.s32 6, %v176
    %v178 = vrot.slane %v107, %v177
    %v179 = vadd.f32 %v173, %v178
    %v180 = vadd.f32 %v174, %v178
    %v181 = vlaneseq
    %v182 = vshrl.u32 %v181, 7
    %v183 = vsub.s32 4, %v182
    %v184 = vrot.slane %v107, %v183
    %vm185 = vcmask 261120
    %v187 = vsel %vm185, %v95, 0
    %v190 = vsel %vm185, %v96, 0
    %192 = vmatprep.subr.mxu0 0.0
    %193 = vmatpush1.msra.mxu0 0.0
    %194 = vmatprep.subr.mxu0 0.0
    %195 = vmatpush1.msra.mxu0 0.0
    %196 = vmatprep.subr.mxu0 0.0
    %197 = vmatpush1.msra.mxu0 0.0
    %198 = vmatprep.subr.mxu0 0.0
    %199 = vmatpush1.msra.mxu0 0.0
    %200 = vmatprep.subr.mxu0 0.0
    %201 = vmatpush1.msra.mxu0 0.0
    %202 = vmatprep.subr.mxu0 0.0
    %203 = vmatpush1.msra.mxu0 0.0
    %204 = vmatprep.subr.mxu0 0.0
    %205 = vmatpush1.msra.mxu0 0.0
    %206 = vmatprep.subr.mxu0 0.0
    %207 = vmatpush1.msra.mxu0 0.0
    %208 = vmatprep.subr.mxu0 0.0
    %209 = vmatpush1.msra.mxu0 0.0
    %210 = vmatprep.subr.mxu0 0.0
    %211 = vmatpush1.msra.mxu0 0.0
    %212 = vmatprep.subr.mxu0 0.0
    %213 = vmatpush1.msra.mxu0 0.0
    %214 = vmatprep.subr.mxu0 0.0
    %215 = vmatpush1.msra.mxu0 0.0
    %216 = vmatprep.subr.mxu0 0.0
    %217 = vmatpush1.msra.mxu0 %v100
    %218 = vmatprep.subr.mxu0 0.0
    %219 = vmatpush1.msra.mxu0 %v99
    %220 = vmatprep.subr.mxu0 0.0
    %221 = vmatpush1.msra.mxu0 %v98
    %222 = vmatprep.subr.mxu0 0.0
    %223 = vmatpush1.msra.mxu0 %v97
    %224 = vmatprep.subr.mxu0 0.0
    %225 = vmatpush2.msra.mxu0 0.0
    %226 = vmatprep.subr.mxu0 0.0
    %227 = vmatpush2.msra.mxu0 0.0
    %228 = vmatprep.subr.mxu0 0.0
    %229 = vmatpush2.msra.mxu0 0.0
    %230 = vmatprep.subr.mxu0 0.0
    %231 = vmatpush2.msra.mxu0 0.0
    %232 = vmatprep.subr.mxu0 0.0
    %233 = vmatpush2.msra.mxu0 0.0
    %234 = vmatprep.subr.mxu0 0.0
    %235 = vmatpush2.msra.mxu0 0.0
    %236 = vmatprep.subr.mxu0 0.0
    %237 = vmatpush2.msra.mxu0 0.0
    %238 = vmatprep.subr.mxu0 0.0
    %239 = vmatpush2.msra.mxu0 0.0
    %240 = vmatprep.subr.mxu0 0.0
    %241 = vmatpush2.msra.mxu0 0.0
    %242 = vmatprep.subr.mxu0 0.0
    %243 = vmatpush2.msra.mxu0 0.0
    %244 = vmatprep.subr.mxu0 0.0
    %245 = vmatpush2.msra.mxu0 0.0
    %246 = vmatprep.subr.mxu0 0.0
    %247 = vmatpush2.msra.mxu0 0.0
    %248 = vmatprep.subr.mxu0 0.0
    %249 = vmatpush2.msra.mxu0 0.0
    %250 = vmatprep.subr.mxu0 0.0
    %251 = vmatpush2.msra.mxu0 0.0
    %252 = vmatprep.subr.mxu0 0.0
    %253 = vmatpush2.msra.mxu0 0.0
    %254 = vmatprep.subr.mxu0 0.0
    %255 = vmatpush2.msra.mxu0 0.0
    %256 = vmatprep.mubr.f32.mxu0 0.0
    %257 = vmatmul.mubr.f32.gmra.mxu0 %v187
    %v258 = vpop.f32.mrf.mxu0
    %v259 = vadd.f32 %v184, %v258
    %v260 = vpop.f32.mrf.mxu0
    %261 = vmatprep.mubr.f32.mxu0 0.0
    %262 = vmatmul.mubr.f32.gmra.mxu0 %v190
    %v263 = vpop.f32.mrf.mxu0
    %v264 = vadd.f32 %v184, %v263
    %v265 = vpop.f32.mrf.mxu0
    %266 = vdwg.mxu0
    %v267 = vsel %vm185, %v259, 0.0
    %268 = vadd.xlane.f32.xlu0 %v267
    %v269 = vpop.xlane.xlu0 %268
    %v270 = vsel %vm185, %v264, 0.0
    %271 = vadd.xlane.f32.xlu0 %v270
    %v272 = vpop.xlane.xlu0 %271
    %v273 = vrcp.pop 32.0
    %v274 = vmul.f32 %v269, %v273
    %v275 = vmul.f32 %v272, %v273
    %v276 = vsub.f32 %v259, %v274
    %v277 = vsub.f32 %v264, %v275
    %v278 = vmul.f32 %v276, %v276
    %v279 = vmul.f32 %v277, %v277
    %v280 = vsel %vm185, %v278, 0.0
    %281 = vadd.xlane.f32.xlu0 %v280
    %v282 = vpop.xlane.xlu0 %281
    %v283 = vsel %vm185, %v279, 0.0
    %284 = vadd.xlane.f32.xlu0 %v283
    %v285 = vpop.xlane.xlu0 %284
    %v286 = vmul.f32 %v282, %v273
    %v287 = vmul.f32 %v285, %v273
    %v288 = vadd.f32 %v286, 1e-05
    %v289 = vadd.f32 %v287, 1e-05
    %v290 = vrsqrt.pop %v288
    %v291 = vrsqrt.pop %v289
    %v292 = vmul.f32 %v276, %v290
    %v293 = vmul.f32 %v277, %v291
    %v294 = vlaneseq
    %v295 = vshrl.u32 %v294, 7
    %v296 = vsub.s32 7, %v295
    %v297 = vrot.slane %v107, %v296
    %v298 = vmul.f32 %v292, %v297
    %v299 = vmul.f32 %v293, %v297
    %v300 = vlaneseq
    %v301 = vshrl.u32 %v300, 7
    %v302 = vsub.s32 0, %v301
    %v303 = vrot.slane %v108, %v302
    %v304 = vadd.f32 %v298, %v303
    %v305 = vadd.f32 %v299, %v303
    %v306 = vlaneseq
    %v307 = vshrl.u32 %v306, 7
    %v308 = vsub.s32 5, %v307
    %v309 = vrot.slane %v107, %v308
    %v311 = vsel %vm185, %v101, 0
    %v314 = vsel %vm185, %v102, 0
    %316 = vmatprep.subr.mxu0 0.0
    %317 = vmatpush1.msra.mxu0 0.0
    %318 = vmatprep.subr.mxu0 0.0
    %319 = vmatpush1.msra.mxu0 0.0
    %320 = vmatprep.subr.mxu0 0.0
    %321 = vmatpush1.msra.mxu0 0.0
    %322 = vmatprep.subr.mxu0 0.0
    %323 = vmatpush1.msra.mxu0 0.0
    %324 = vmatprep.subr.mxu0 0.0
    %325 = vmatpush1.msra.mxu0 0.0
    %326 = vmatprep.subr.mxu0 0.0
    %327 = vmatpush1.msra.mxu0 0.0
    %328 = vmatprep.subr.mxu0 0.0
    %329 = vmatpush1.msra.mxu0 0.0
    %330 = vmatprep.subr.mxu0 0.0
    %331 = vmatpush1.msra.mxu0 0.0
    %332 = vmatprep.subr.mxu0 0.0
    %333 = vmatpush1.msra.mxu0 0.0
    %334 = vmatprep.subr.mxu0 0.0
    %335 = vmatpush1.msra.mxu0 0.0
    %336 = vmatprep.subr.mxu0 0.0
    %337 = vmatpush1.msra.mxu0 0.0
    %338 = vmatprep.subr.mxu0 0.0
    %339 = vmatpush1.msra.mxu0 0.0
    %340 = vmatprep.subr.mxu0 0.0
    %341 = vmatpush1.msra.mxu0 %v106
    %342 = vmatprep.subr.mxu0 0.0
    %343 = vmatpush1.msra.mxu0 %v105
    %344 = vmatprep.subr.mxu0 0.0
    %345 = vmatpush1.msra.mxu0 %v104
    %346 = vmatprep.subr.mxu0 0.0
    %347 = vmatpush1.msra.mxu0 %v103
    %348 = vmatprep.subr.mxu0 0.0
    %349 = vmatpush2.msra.mxu0 0.0
    %350 = vmatprep.subr.mxu0 0.0
    %351 = vmatpush2.msra.mxu0 0.0
    %352 = vmatprep.subr.mxu0 0.0
    %353 = vmatpush2.msra.mxu0 0.0
    %354 = vmatprep.subr.mxu0 0.0
    %355 = vmatpush2.msra.mxu0 0.0
    %356 = vmatprep.subr.mxu0 0.0
    %357 = vmatpush2.msra.mxu0 0.0
    %358 = vmatprep.subr.mxu0 0.0
    %359 = vmatpush2.msra.mxu0 0.0
    %360 = vmatprep.subr.mxu0 0.0
    %361 = vmatpush2.msra.mxu0 0.0
    %362 = vmatprep.subr.mxu0 0.0
    %363 = vmatpush2.msra.mxu0 0.0
    %364 = vmatprep.subr.mxu0 0.0
    %365 = vmatpush2.msra.mxu0 0.0
    %366 = vmatprep.subr.mxu0 0.0
    %367 = vmatpush2.msra.mxu0 0.0
    %368 = vmatprep.subr.mxu0 0.0
    %369 = vmatpush2.msra.mxu0 0.0
    %370 = vmatprep.subr.mxu0 0.0
    %371 = vmatpush2.msra.mxu0 0.0
    %372 = vmatprep.subr.mxu0 0.0
    %373 = vmatpush2.msra.mxu0 0.0
    %374 = vmatprep.subr.mxu0 0.0
    %375 = vmatpush2.msra.mxu0 0.0
    %376 = vmatprep.subr.mxu0 0.0
    %377 = vmatpush2.msra.mxu0 0.0
    %378 = vmatprep.subr.mxu0 0.0
    %379 = vmatpush2.msra.mxu0 0.0
    %380 = vmatprep.mubr.f32.mxu0 0.0
    %381 = vmatmul.mubr.f32.gmra.mxu0 %v311
    %v382 = vpop.f32.mrf.mxu0
    %v383 = vadd.f32 %v309, %v382
    %v384 = vpop.f32.mrf.mxu0
    %385 = vmatprep.mubr.f32.mxu0 0.0
    %386 = vmatmul.mubr.f32.gmra.mxu0 %v314
    %v387 = vpop.f32.mrf.mxu0
    %v388 = vadd.f32 %v309, %v387
    %v389 = vpop.f32.mrf.mxu0
    %390 = vdwg.mxu0
    %v391 = vsel %vm185, %v383, 0.0
    %392 = vadd.xlane.f32.xlu0 %v391
    %v393 = vpop.xlane.xlu0 %392
    %v394 = vsel %vm185, %v388, 0.0
    %395 = vadd.xlane.f32.xlu0 %v394
    %v396 = vpop.xlane.xlu0 %395
    %v397 = vmul.f32 %v393, %v273
    %v398 = vmul.f32 %v396, %v273
    %v399 = vsub.f32 %v383, %v397
    %v400 = vsub.f32 %v388, %v398
    %v401 = vmul.f32 %v399, %v399
    %v402 = vmul.f32 %v400, %v400
    %v403 = vsel %vm185, %v401, 0.0
    %404 = vadd.xlane.f32.xlu0 %v403
    %v405 = vpop.xlane.xlu0 %404
    %v406 = vsel %vm185, %v402, 0.0
    %407 = vadd.xlane.f32.xlu0 %v406
    %v408 = vpop.xlane.xlu0 %407
    %v409 = vmul.f32 %v405, %v273
    %v410 = vmul.f32 %v408, %v273
    %v411 = vadd.f32 %v409, 1e-05
    %v412 = vadd.f32 %v410, 1e-05
    %v413 = vrsqrt.pop %v411
    %v414 = vrsqrt.pop %v412
    %v415 = vmul.f32 %v399, %v413
    %v416 = vmul.f32 %v400, %v414
    %v417 = vlaneseq
    %v418 = vshrl.u32 %v417, 7
    %v419 = vsub.s32 1, %v418
    %v420 = vrot.slane %v108, %v419
    %v421 = vmul.f32 %v415, %v420
    %v422 = vmul.f32 %v416, %v420
    %v423 = vlaneseq
    %v424 = vshrl.u32 %v423, 7
    %v425 = vsub.s32 2, %v424
    %v426 = vrot.slane %v108, %v425
    %v427 = vadd.f32 %v421, %v426
    %v428 = vadd.f32 %v422, %v426
    %v429 = vsel %vm185, %v179, 0.0
    %430 = vadd.xlane.f32.xlu0 %v429
    %v431 = vpop.xlane.xlu0 %430
    %v432 = vsel %vm185, %v180, 0.0
    %433 = vadd.xlane.f32.xlu0 %v432
    %v434 = vpop.xlane.xlu0 %433
    %v435 = vmul.f32 %v431, %v273
    %v436 = vmul.f32 %v434, %v273
    %v437 = vsub.f32 %v179, %v435
    %v438 = vsub.f32 %v180, %v436
    %v439 = vmul.f32 %v437, %v437
    %v440 = vmul.f32 %v438, %v438
    %v441 = vsel %vm185, %v439, 0.0
    %442 = vadd.xlane.f32.xlu0 %v441
    %v443 = vpop.xlane.xlu0 %442
    %v444 = vsel %vm185, %v440, 0.0
    %445 = vadd.xlane.f32.xlu0 %v444
    %v446 = vpop.xlane.xlu0 %445
    %v447 = vmul.f32 %v443, %v273
    %v448 = vmul.f32 %v446, %v273
    %v449 = vadd.f32 %v447, 1e-05
    %v450 = vadd.f32 %v448, 1e-05
    %v451 = vrsqrt.pop %v449
    %v452 = vrsqrt.pop %v450
    %v453 = vmul.f32 %v437, %v451
    %v454 = vmul.f32 %v438, %v452
    %v455 = vlaneseq
    %v456 = vshrl.u32 %v455, 7
    %v457 = vsub.s32 3, %v456
    %v458 = vrot.slane %v108, %v457
    %v459 = vmul.f32 %v453, %v458
    %v460 = vmul.f32 %v454, %v458
    %v461 = vlaneseq
    %v462 = vshrl.u32 %v461, 7
    %v463 = vsub.s32 4, %v462
    %v464 = vrot.slane %v108, %v463
    %v465 = vadd.f32 %v459, %v464
    %v466 = vadd.f32 %v460, %v464
    %v467 = vadd.f32 %v304, %v427
    %v468 = vadd.f32 %v305, %v428
    %v469 = vadd.f32 %v467, %v465
    %v470 = vadd.f32 %v468, %v466
    %v471 = vld [vmem:[#allocation5] sm:$0xff]
    %v472 = vld [vmem:[#allocation5 + $0x8] sm:$0xff]
    %v473 = vadd.f32 %v469, %v471
    %v474 = vadd.f32 %v470, %v472
    %v475 = vmul.f32 %v473, 0.5
    %v476 = vmul.f32 %v474, 0.5
    %v477 = vmul.f32 %v473, 0.70710677
    %v478 = vmul.f32 %v474, 0.70710677
    %v479 = verf.f32.pop %v477
    %v480 = verf.f32.pop %v478
    %v481 = vadd.f32 %v479, 1.0
    %v482 = vadd.f32 %v480, 1.0
    %v483 = vmul.f32 %v475, %v481
    %v484 = vmul.f32 %v476, %v482
    %485 = vst.msk [vmem:[#allocation11] sm:$0xff] %vm185, %v483
    %486 = vst.msk [vmem:[#allocation11 + $0x8] sm:$0xff] %vm185, %v484
    // Predicated region
    $region50: #{tpu_custom_call.1} parent=1 // pred_check
      _
    $region51: #{tpu_custom_call.1} parent=1 // pred_check_branch
      %488 = sbr.rel (0) target = $region53
    $region52: #{tpu_custom_call.1} parent=1 // pred_region
      %s490 = ssub.s32 256, 256
      %491 = vsyncadd [#allocation4], %s490
      %s492 = sshll.u32 [#allocation11], 4
      %s493 = int_to_ptr.vmem [resolvable:$true] %s492
      %498 = dma.vmem_to_hbm [thread:$0]  %s493, 256, %s7, [#allocation4], 128, 128, 8
    $region53: #{tpu_custom_call.1} parent=1 // pred_fallthru
      _
    // Predicated region
    $region54: #{tpu_custom_call.1} parent=1 // pred_check
      _
    $region55: #{tpu_custom_call.1} parent=1 // pred_check_branch
      %500 = sbr.rel (0) target = $region57
    $region56: #{tpu_custom_call.1} parent=1 // pred_region
      %501 = dma.done [#allocation4], 256
    $region57: #{tpu_custom_call.1} parent=1 // pred_fallthru
      _
    %502 = vsyncpa [#allocation3], 1
    %503 = vsyncpa [#allocation6], 1
    %504 = vsyncpa [#allocation9], 1
    %505 = vsyncpa [#allocation4], 1

</llo_original>
